<compile_context>
chip_gen: v6e
topology: v6e:2x2x1
jax: 0.10.0
libtpu: 0.0.40
codegen_flags: <defaults>
</compile_context>

<pallas_src>
import jax
import jax.numpy as jnp
from jax.experimental import pallas as pl
from jax.experimental.pallas import tpu as pltpu


def _attention_mask_kernel(thr_ref, x_ref, m_ref, out_ref, keep_ref):
    # thr_ref : SMEM f32[1]              (score threshold)
    # x_ref   : VMEM f32[1, C, TS, 128]  (features, lane axis = spatial%128)
    # m_ref   : VMEM f32[1, 1, TS, 128]  (mask scores)
    # out_ref : VMEM f32[1, C, TS, 128]  (masked features)
    # keep_ref: VMEM i8 [1, 1, TS, 128]  (keep mask)
    thr = thr_ref[0]
    x = x_ref[0]                                   # [C, TS, 128]
    s = m_ref[0, 0]                                # [TS, 128]
    C = x.shape[0]

    # (x_expanded.F > 0).any(dim=1): C-1 full-vreg ORs on the VPU, compare
    # fused into each step (no [C, TS, 128] bool array kept live).
    any_pos = x[0] > 0.0                           # [TS, 128]
    for c in range(1, C):
        any_pos = jnp.logical_or(any_pos, x[c] > 0.0)

    # (mask_in_xcoords.F > threshold) & any_pos
    target = jnp.logical_and(s > thr, any_pos)     # [TS, 128]

    # MinkowskiPruning keeps rows where target is True -> masked features.
    out_ref[0] = jnp.where(target[None], x, 0.0).astype(out_ref.dtype)
    keep_ref[0, 0] = target.astype(keep_ref.dtype)


def _choose_spatial_tile(S, C, itemsize, batch,
                         budget_bytes=16 << 20, min_steps=4):
    # Double-buffered VMEM bytes per 128-lane "supergroup" of spatial elems:
    #   x in + x out: 2*C*itemsize ; mask in: 4 (f32) ; keep out: 1 (i8).
    # With the 4D (S,128) layout there is no hidden sublane padding, so this
    # accounting is exact.
    per_sg = 2 * 128 * (2 * C * itemsize + 4 + 1)
    cap = max(32, ((budget_bytes // per_sg) // 32) * 32)   # multiple of 32 (i8 tile)
    ts = S if S <= cap else cap
    # v7x megacore: prefer >= min_steps total grid steps (both TensorCores fed)
    # when the problem is big enough; v5e/v6e (1 TC) unaffected.
    if batch * pl.cdiv(S, ts) < min_steps and S >= 64:
        want_tiles = pl.cdiv(min_steps, max(batch, 1))
        ts = min(ts, max(32, (pl.cdiv(S, want_tiles) // 32) * 32))
    return ts


def attention_mask(x_nchw, mask_nchw, score_threshold=0.5, spatial_tile=None):
    """x_nchw:    [B, Cx, H, W] float features (0 == absent coordinate)
       mask_nchw: [B, 1,  H, W] float scores   (0 == absent coordinate)
       returns (x_pruned [B, Cx, H, W], keep_mask [B, H, W] bool)"""
    B, C, H, W = x_nchw.shape
    Bm, Cm, Hm, Wm = mask_nchw.shape
    assert (B, H, W) == (Bm, Hm, Wm) and Cm == 1

    HW = H * W
    hw128 = pl.cdiv(HW, 128) * 128
    x = x_nchw.reshape(B, C, HW)                   # free reshape (no transpose)
    m = mask_nchw.reshape(B, 1, HW)
    if hw128 != HW:
        # Minimal (<128-elem) pad so the (S,128) fold is exact; no tile-multiple pad.
        x = jnp.pad(x, ((0, 0), (0, 0), (0, hw128 - HW)))
        m = jnp.pad(m, ((0, 0), (0, 0), (0, hw128 - HW)))
    S = hw128 // 128
    x = x.reshape(B, C, S, 128)                    # lane-dense 4D layout
    m = m.reshape(B, 1, S, 128)

    ts = spatial_tile if spatial_tile is not None else _choose_spatial_tile(
        S, C, x.dtype.itemsize, B)
    n_tiles = pl.cdiv(S, ts)                       # partial last block is masked by Pallas

    thr = jnp.full((1,), score_threshold, dtype=jnp.float32)

    elem_bytes = x.dtype.itemsize
    cost = pl.CostEstimate(
        flops=3 * B * C * S * 128,
        transcendentals=0,
        bytes_accessed=(2 * B * C * S * 128 * elem_bytes   # x in + out
                        + B * S * 128 * 4                  # mask in (f32)
                        + B * S * 128 * 1),                # keep out (i8)
    )

    out, keep = pl.pallas_call(
        _attention_mask_kernel,
        out_shape=(
            jax.ShapeDtypeStruct((B, C, S, 128), x.dtype),
            jax.ShapeDtypeStruct((B, 1, S, 128), jnp.int8),
        ),
        grid=(B, n_tiles),
        in_specs=[
            pl.BlockSpec(memory_space=pltpu.MemorySpace.SMEM),         # threshold
            pl.BlockSpec((1, C, ts, 128), lambda b, s: (b, 0, s, 0)),  # x
            pl.BlockSpec((1, 1, ts, 128), lambda b, s: (b, 0, s, 0)),  # mask
        ],
        out_specs=(
            pl.BlockSpec((1, C, ts, 128), lambda b, s: (b, 0, s, 0)),  # masked feats
            pl.BlockSpec((1, 1, ts, 128), lambda b, s: (b, 0, s, 0)),  # keep (i8)
        ),
        compiler_params=pltpu.CompilerParams(
            dimension_semantics=("parallel", "parallel"),
            vmem_limit_bytes=32 << 20,
        ),
        cost_estimate=cost,
        # TODO(synk): pass input_output_aliases={1: 0} when the caller donates x,
        # to alias x -> pruned output and halve peak HBM footprint.
    )(thr, x, m)

    out = out.reshape(B, C, S * 128)
    keep = keep.reshape(B, S * 128)
    if hw128 != HW:
        out = out[:, :, :HW]
        keep = keep[:, :HW]
    x_pruned = out.reshape(B, C, H, W)
    keep = keep.astype(jnp.bool_).reshape(B, H, W)
    # TODO(synk): MinkowskiPruning's dynamic row compaction (variable N_out)
    # has no static-shape Pallas equivalent; callers can gather with `keep`.
    return x_pruned, keep


def _reference(x_nchw, mask_nchw, thr=0.5):
    # Matches the torch module: (x_expanded.F > 0).any(dim=1)  (strict > 0).
    any_pos = jnp.any(x_nchw > 0.0, axis=1)               # [B, H, W]
    target = jnp.logical_and(mask_nchw[:, 0] > thr, any_pos)
    out = jnp.where(target[:, None], x_nchw, 0.0)
    return out, target


if __name__ == "__main__":
    key = jax.random.PRNGKey(0)
    k1, k2, k3 = jax.random.split(key, 3)

    B, C, H, W = 2, 4, 16, 16
    x = jax.random.normal(k1, (B, C, H, W), dtype=jnp.float32)
    # emulate sparsity: zero out ~half the coordinates of x
    occ = (jax.random.uniform(k2, (B, 1, H, W)) > 0.5).astype(jnp.float32)
    x = x * occ
    mask = jax.random.uniform(k3, (B, 1, H, W), dtype=jnp.float32)

    x_pruned, keep = attention_mask(x, mask, score_threshold=0.5)
    jax.block_until_ready((x_pruned, keep))

    ref_out, ref_keep = _reference(x, mask, 0.5)
    assert jnp.allclose(x_pruned, ref_out, atol=1e-6)
    assert jnp.array_equal(keep, ref_keep)

    print("KERNEL_OK")
</pallas_src>

<mosaic_0001>
module attributes {stable_mosaic.version = 11 : i64} {
  func.func @_attention_mask_kernel(%arg0: i32, %arg1: i32, %arg2: memref<1xf32, #tpu.memory_space<smem>>, %arg3: memref<1x4x2x128xf32, #tpu.memory_space<vmem>>, %arg4: memref<1x1x2x128xf32, #tpu.memory_space<vmem>>, %arg5: memref<1x4x2x128xf32, #tpu.memory_space<vmem>>, %arg6: memref<1x1x2x128xi8, #tpu.memory_space<vmem>>) attributes {dimension_semantics = [#tpu.dimension_semantics<parallel>, #tpu.dimension_semantics<parallel>], iteration_bounds = array<i64: 2, 1>, scalar_prefetch = 0 : i64, scratch_operands = 0 : i64, tpu.core_type = #tpu.core_type<tc>, window_params = [{transform_indices = @transform_0, window_bounds = array<i64: 1>}, {transform_indices = @transform_1, window_bounds = array<i64: 1, 4, 2, 128>}, {transform_indices = @transform_2, window_bounds = array<i64: 1, 1, 2, 128>}, {transform_indices = @transform_3, window_bounds = array<i64: 1, 4, 2, 128>}, {transform_indices = @transform_4, window_bounds = array<i64: 1, 1, 2, 128>}]} {
    %c0 = arith.constant 0 : index
    %0 = memref.load %arg2[%c0] : memref<1xf32, #tpu.memory_space<smem>>
    %c0_0 = arith.constant 0 : index
    %c0_1 = arith.constant 0 : index
    %c0_2 = arith.constant 0 : index
    %c0_3 = arith.constant 0 : index
    %1 = vector.load %arg3[%c0_0, %c0_1, %c0_2, %c0_3] : memref<1x4x2x128xf32, #tpu.memory_space<vmem>>, vector<1x4x2x128xf32>
    %2 = vector.shape_cast %1 : vector<1x4x2x128xf32> to vector<4x2x128xf32>
    %c0_4 = arith.constant 0 : index
    %c0_5 = arith.constant 0 : index
    %c0_6 = arith.constant 0 : index
    %c0_7 = arith.constant 0 : index
    %3 = vector.load %arg4[%c0_4, %c0_5, %c0_6, %c0_7] : memref<1x1x2x128xf32, #tpu.memory_space<vmem>>, vector<1x1x2x128xf32>
    %4 = vector.shape_cast %3 : vector<1x1x2x128xf32> to vector<2x128xf32>
    %5 = vector.extract_strided_slice %2 {offsets = [0, 0, 0], sizes = [1, 2, 128], strides = [1, 1, 1]} : vector<4x2x128xf32> to vector<1x2x128xf32>
    %6 = vector.shape_cast %5 : vector<1x2x128xf32> to vector<2x128xf32>
    %cst = arith.constant 0.000000e+00 : f32
    %7 = vector.broadcast %cst : f32 to vector<2x128xf32>
    %8 = arith.cmpf ogt, %6, %7 : vector<2x128xf32>
    %9 = vector.extract_strided_slice %2 {offsets = [1, 0, 0], sizes = [1, 2, 128], strides = [1, 1, 1]} : vector<4x2x128xf32> to vector<1x2x128xf32>
    %10 = vector.shape_cast %9 : vector<1x2x128xf32> to vector<2x128xf32>
    %cst_8 = arith.constant 0.000000e+00 : f32
    %11 = vector.broadcast %cst_8 : f32 to vector<2x128xf32>
    %12 = arith.cmpf ogt, %10, %11 : vector<2x128xf32>
    %13 = arith.ori %8, %12 : vector<2x128xi1>
    %14 = vector.extract_strided_slice %2 {offsets = [2, 0, 0], sizes = [1, 2, 128], strides = [1, 1, 1]} : vector<4x2x128xf32> to vector<1x2x128xf32>
    %15 = vector.shape_cast %14 : vector<1x2x128xf32> to vector<2x128xf32>
    %cst_9 = arith.constant 0.000000e+00 : f32
    %16 = vector.broadcast %cst_9 : f32 to vector<2x128xf32>
    %17 = arith.cmpf ogt, %15, %16 : vector<2x128xf32>
    %18 = arith.ori %13, %17 : vector<2x128xi1>
    %19 = vector.extract_strided_slice %2 {offsets = [3, 0, 0], sizes = [1, 2, 128], strides = [1, 1, 1]} : vector<4x2x128xf32> to vector<1x2x128xf32>
    %20 = vector.shape_cast %19 : vector<1x2x128xf32> to vector<2x128xf32>
    %cst_10 = arith.constant 0.000000e+00 : f32
    %21 = vector.broadcast %cst_10 : f32 to vector<2x128xf32>
    %22 = arith.cmpf ogt, %20, %21 : vector<2x128xf32>
    %23 = arith.ori %18, %22 : vector<2x128xi1>
    %24 = vector.broadcast %0 : f32 to vector<2x128xf32>
    %25 = arith.cmpf ogt, %4, %24 : vector<2x128xf32>
    %26 = arith.andi %25, %23 : vector<2x128xi1>
    %27 = vector.shape_cast %26 : vector<2x128xi1> to vector<1x2x128xi1>
    %cst_11 = arith.constant 0.000000e+00 : f32
    %28 = vector.shape_cast %27 : vector<1x2x128xi1> to vector<1x2x128xi1>
    %29 = vector.broadcast %28 : vector<1x2x128xi1> to vector<4x2x128xi1>
    %30 = vector.broadcast %cst_11 : f32 to vector<4x2x128xf32>
    %31 = arith.select %29, %2, %30 : vector<4x2x128xi1>, vector<4x2x128xf32>
    %c0_12 = arith.constant 0 : index
    %c0_13 = arith.constant 0 : index
    %c0_14 = arith.constant 0 : index
    %c0_15 = arith.constant 0 : index
    %32 = vector.load %arg5[%c0_12, %c0_13, %c0_14, %c0_15] : memref<1x4x2x128xf32, #tpu.memory_space<vmem>>, vector<1x4x2x128xf32>
    %33 = vector.shape_cast %32 : vector<1x4x2x128xf32> to vector<4x2x128xf32>
    %34 = vector.shape_cast %31 : vector<4x2x128xf32> to vector<1x4x2x128xf32>
    tpu.vector_store %arg5[%c0_12, %c0_13, %c0_14, %c0_15], %34 {strides = array<i32>} : memref<1x4x2x128xf32, #tpu.memory_space<vmem>>, vector<1x4x2x128xf32>,
    %35 = arith.extui %26 : vector<2x128xi1> to vector<2x128xi8>
    %c0_16 = arith.constant 0 : index
    %c0_17 = arith.constant 0 : index
    %c0_18 = arith.constant 0 : index
    %c0_19 = arith.constant 0 : index
    %36 = vector.load %arg6[%c0_16, %c0_17, %c0_18, %c0_19] : memref<1x1x2x128xi8, #tpu.memory_space<vmem>>, vector<1x1x2x128xi8>
    %37 = vector.shape_cast %36 : vector<1x1x2x128xi8> to vector<2x128xi8>
    %38 = vector.shape_cast %35 : vector<2x128xi8> to vector<1x1x2x128xi8>
    tpu.vector_store %arg6[%c0_16, %c0_17, %c0_18, %c0_19], %38 {strides = array<i32>} : memref<1x1x2x128xi8, #tpu.memory_space<vmem>>, vector<1x1x2x128xi8>,
    return
  }
  func.func @transform_0(%arg0: i32, %arg1: i32) -> i32 {
    %c0_i32 = arith.constant 0 : i32
    %c0_i32_0 = arith.constant 0 : i32
    return %c0_i32 : i32
  }
  func.func @transform_1(%arg0: i32, %arg1: i32) -> (i32, i32, i32, i32) {
    %c0_i32 = arith.constant 0 : i32
    %c0_i32_0 = arith.constant 0 : i32
    %c0_i32_1 = arith.constant 0 : i32
    return %arg0, %c0_i32, %arg1, %c0_i32_0 : i32, i32, i32, i32
  }
  func.func @transform_2(%arg0: i32, %arg1: i32) -> (i32, i32, i32, i32) {
    %c0_i32 = arith.constant 0 : i32
    %c0_i32_0 = arith.constant 0 : i32
    %c0_i32_1 = arith.constant 0 : i32
    return %arg0, %c0_i32, %arg1, %c0_i32_0 : i32, i32, i32, i32
  }
  func.func @transform_3(%arg0: i32, %arg1: i32) -> (i32, i32, i32, i32) {
    %c0_i32 = arith.constant 0 : i32
    %c0_i32_0 = arith.constant 0 : i32
    %c0_i32_1 = arith.constant 0 : i32
    return %arg0, %c0_i32, %arg1, %c0_i32_0 : i32, i32, i32, i32
  }
  func.func @transform_4(%arg0: i32, %arg1: i32) -> (i32, i32, i32, i32) {
    %c0_i32 = arith.constant 0 : i32
    %c0_i32_0 = arith.constant 0 : i32
    %c0_i32_1 = arith.constant 0 : i32
    return %arg0, %c0_i32, %arg1, %c0_i32_0 : i32, i32, i32, i32
  }
}

</mosaic_0001>

<llo_original>
// kernel: tpu_custom_call.1
$region0: #{tpu_custom_call.1}
  #allocation0 [shape = 'u32[]', space=smem, size = 0x4, offset = 0x4, fixed_abs, tag = 'smem constant byte address 0x4 - core index']
  #allocation1 [shape = 'u32[144,128]{1,0:T(1,128)}', space=vmem, size = 0x12000, scoped, tag = 'internal scratch']
  #allocation2 [shape = 'f32[1]{0:T(128)S(6)}', space=smem, size = 0x200, scoped, tag = 'scoped memory for tpu_custom_call.1']
  %s0 = inlined_call_operand.<no memory space> [shape: f32[1], index: 0, kind: input, shape index: {}]
  %s1 = inlined_call_operand.hbm [shape: f32[2,4,2,128], index: 1, kind: input, shape index: {}]
  %s2 = inlined_call_operand.hbm [shape: f32[2,1,2,128], index: 2, kind: input, shape index: {}]
  %s3 = inlined_call_operand.hbm [shape: f32[2,4,2,128], index: 3, kind: output, shape index: {0}]
  %s4 = inlined_call_operand.hbm [shape: s8[2,1,2,128], index: 4, kind: output, shape index: {1}]
  %5 = xla_tuple %s3, %s4
  %s6 = sld [smem:[#allocation0]]
  $region61: #{tpu_custom_call.1} parent=0
    _
  %s8 = ssub.s32 1, %s6
  %s9 = scalar_select 0, %s8, %s6
  %10 = sst [smem:[#allocation2]] %s0
  $region1: #{tpu_custom_call.1} parent=0
    #allocation3 [shape = 'u8[8192]{0}', space=vmem, size = 0x2000, scoped, tag = 'input window, operand 1']
    #allocation4 [shape = 's32[2]{0}', space=sflag, size = 0x8, scoped, tag = 'scoped memory for tpu_custom_call.1']
    #allocation5 [shape = 's32[2]{0}', space=sflag, size = 0x8, scoped, tag = 'scoped memory for tpu_custom_call.1']
    #allocation6 [shape = 'u8[2048]{0}', space=vmem, size = 0x800, scoped, tag = 'input window, operand 2']
    #allocation7 [shape = 's32[2]{0}', space=sflag, size = 0x8, scoped, tag = 'scoped memory for tpu_custom_call.1']
    #allocation8 [shape = 'u8[8192]{0}', space=vmem, size = 0x2000, scoped, tag = 'output window, operand 0']
    #allocation9 [shape = 'u8[1024]{0}', space=vmem, size = 0x400, scoped, tag = 'output window, operand 1']
    #allocation10 [shape = 's32[2]{0}', space=sflag, size = 0x8, scoped, tag = 'scoped memory for tpu_custom_call.1']
    %11 = vsyncpa [#allocation4], 0
    %s12 = scalar_lea.sflag [#allocation4], 1
    %13 = vsyncpa %s12, 0
    %14 = vsyncpa [#allocation7], 0
    %s15 = scalar_lea.sflag [#allocation7], 1
    %16 = vsyncpa %s15, 0
    %17 = vsyncpa [#allocation5], 0
    %s18 = scalar_lea.sflag [#allocation5], 1
    %19 = vsyncpa %s18, 0
    %20 = vsyncpa [#allocation10], 0
    %s21 = scalar_lea.sflag [#allocation10], 1
    %22 = vsyncpa %s21, 0
    loop: start=0, step=1, limit=4
    $region2: #{tpu_custom_call.1} parent=1 // loop_pre_header
      _
    $region3: #{tpu_custom_call.1} parent=1 // loop_header
      %s24 = sphi 0, %s28
      %p25 = scmp.ge.s32.totalorder %s24, 4
      %s31 = sphi 0, %s43
      %s32 = sphi 0, %s39
      %s33 = sphi 0, %s31
      %s34 = sphi 0, %s32
      %s35 = sphi 0, %s33
      %s36 = sphi 0, %s34
      %s44 = sphi 0, %s44
      %s46 = sphi 0, %s44
      %s47 = sphi 0, %s46
      %s61 = sphi 0, %s47
      %s69 = sphi 0, %s71
      %s72 = sphi 0, %s69
      %s73 = sphi 0, %s72
      %s89 = sphi 0, %s73
      %s97 = sphi 0, %s99
      %s100 = sphi 0, %s97
      %s101 = sphi 0, %s100
      %s117 = sphi 0, %s101
      %s125 = sphi 0, %s127
      %s128 = sphi 0, %s125
      %s129 = sphi 0, %s128
      %s145 = sphi 0, %s129
      %s153 = sphi 0, %s155
      %s156 = sphi 0, %s153
      %s157 = sphi 0, %s156
      %s173 = sphi 0, %s157
    $region4: #{tpu_custom_call.1} parent=1 // loop_header_branch
      %27 = sbr.rel (%p25) target = $region8
    $region5: #{tpu_custom_call.1} parent=1 // loop_body
      %s29 = ssub.s32 %s24, 1
      %s30 = ssub.s32 %s24, 2
      %s37 = sadd.s32 1, %s32
      %p38 = scmp.ge.s32.totalorder %s37, 1
      %s39 = scalar_select %p38, 0, %s37
      %s40 = sadd.s32 1, %s31
      %s41 = scalar_select %p38, %s40, %s31
      %p42 = scmp.ge.s32.totalorder %s41, 2
      %s43 = scalar_select %p42, 0, %s41
      %s45 = sadd.s32 %s44, 1
      %p48 = scmp.eq.s32.totalorder %s24, 1
      %p49 = scmp.ne.s32.totalorder %s44, %s46
      %p50 = scmp.eq.s32.totalorder %s24, 0
      %p51 = por %p49, %p50
      %p52 = scmp.ne.s32.totalorder %s44, %s46
      %p53 = scmp.eq.s32.totalorder %s29, 1
      %p54 = por %p52, %p53
      %p55 = scmp.ne.s32.totalorder %s46, %s47
      %p56 = scmp.eq.s32.totalorder %s29, 0
      %p57 = por %p55, %p56
      %p58 = scmp.ne.s32.totalorder %s46, %s47
      %p59 = scmp.eq.s32.totalorder %s30, 1
      %p60 = por %p58, %p59
      %p62 = scmp.ne.s32.totalorder %s47, %s61
      %p63 = scmp.eq.s32.totalorder %s30, 0
      %p64 = por %p62, %p63
      %s65 = ssub.s32 %s31, %s43
      %s66 = ssub.s32 %s32, %s39
      %s67 = sor.u32 %s65, %s66
      %p68 = scmp.eq.s32.totalorder %s67, 0
      %s70 = sadd.s32 %s69, 1
      %s71 = scalar_select %p68, %s69, %s70
      %p74 = pneg %p68
      %p75 = scmp.eq.s32.totalorder %s24, 1
      %p76 = por %p74, %p75
      %p77 = scmp.ne.s32.totalorder %s69, %s72
      %p78 = scmp.eq.s32.totalorder %s24, 0
      %p79 = por %p77, %p78
      %p80 = scmp.ne.s32.totalorder %s69, %s72
      %p81 = scmp.eq.s32.totalorder %s29, 1
      %p82 = por %p80, %p81
      %p83 = scmp.ne.s32.totalorder %s72, %s73
      %p84 = scmp.eq.s32.totalorder %s29, 0
      %p85 = por %p83, %p84
      %p86 = scmp.ne.s32.totalorder %s72, %s73
      %p87 = scmp.eq.s32.totalorder %s30, 1
      %p88 = por %p86, %p87
      %p90 = scmp.ne.s32.totalorder %s73, %s89
      %p91 = scmp.eq.s32.totalorder %s30, 0
      %p92 = por %p90, %p91
      %s93 = ssub.s32 %s31, %s43
      %s94 = ssub.s32 %s32, %s39
      %s95 = sor.u32 %s93, %s94
      %p96 = scmp.eq.s32.totalorder %s95, 0
      %s98 = sadd.s32 %s97, 1
      %s99 = scalar_select %p96, %s97, %s98
      %p102 = pneg %p96
      %p103 = scmp.eq.s32.totalorder %s24, 1
      %p104 = por %p102, %p103
      %p105 = scmp.ne.s32.totalorder %s97, %s100
      %p106 = scmp.eq.s32.totalorder %s24, 0
      %p107 = por %p105, %p106
      %p108 = scmp.ne.s32.totalorder %s97, %s100
      %p109 = scmp.eq.s32.totalorder %s29, 1
      %p110 = por %p108, %p109
      %p111 = scmp.ne.s32.totalorder %s100, %s101
      %p112 = scmp.eq.s32.totalorder %s29, 0
      %p113 = por %p111, %p112
      %p114 = scmp.ne.s32.totalorder %s100, %s101
      %p115 = scmp.eq.s32.totalorder %s30, 1
      %p116 = por %p114, %p115
      %p118 = scmp.ne.s32.totalorder %s101, %s117
      %p119 = scmp.eq.s32.totalorder %s30, 0
      %p120 = por %p118, %p119
      %s121 = ssub.s32 %s31, %s43
      %s122 = ssub.s32 %s32, %s39
      %s123 = sor.u32 %s121, %s122
      %p124 = scmp.eq.s32.totalorder %s123, 0
      %s126 = sadd.s32 %s125, 1
      %s127 = scalar_select %p124, %s125, %s126
      %p130 = pneg %p124
      %p131 = scmp.eq.s32.totalorder %s24, 1
      %p132 = por %p130, %p131
      %p133 = scmp.ne.s32.totalorder %s125, %s128
      %p134 = scmp.eq.s32.totalorder %s24, 0
      %p135 = por %p133, %p134
      %p136 = scmp.ne.s32.totalorder %s125, %s128
      %p137 = scmp.eq.s32.totalorder %s29, 1
      %p138 = por %p136, %p137
      %p139 = scmp.ne.s32.totalorder %s128, %s129
      %p140 = scmp.eq.s32.totalorder %s29, 0
      %p141 = por %p139, %p140
      %p142 = scmp.ne.s32.totalorder %s128, %s129
      %p143 = scmp.eq.s32.totalorder %s30, 1
      %p144 = por %p142, %p143
      %p146 = scmp.ne.s32.totalorder %s129, %s145
      %p147 = scmp.eq.s32.totalorder %s30, 0
      %p148 = por %p146, %p147
      %s149 = ssub.s32 %s31, %s43
      %s150 = ssub.s32 %s32, %s39
      %s151 = sor.u32 %s149, %s150
      %p152 = scmp.eq.s32.totalorder %s151, 0
      %s154 = sadd.s32 %s153, 1
      %s155 = scalar_select %p152, %s153, %s154
      %p158 = pneg %p152
      %p159 = scmp.eq.s32.totalorder %s24, 1
      %p160 = por %p158, %p159
      %p161 = scmp.ne.s32.totalorder %s153, %s156
      %p162 = scmp.eq.s32.totalorder %s24, 0
      %p163 = por %p161, %p162
      %p164 = scmp.ne.s32.totalorder %s153, %s156
      %p165 = scmp.eq.s32.totalorder %s29, 1
      %p166 = por %p164, %p165
      %p167 = scmp.ne.s32.totalorder %s156, %s157
      %p168 = scmp.eq.s32.totalorder %s29, 0
      %p169 = por %p167, %p168
      %p170 = scmp.ne.s32.totalorder %s156, %s157
      %p171 = scmp.eq.s32.totalorder %s30, 1
      %p172 = por %p170, %p171
      %p174 = scmp.ne.s32.totalorder %s157, %s173
      %p175 = scmp.eq.s32.totalorder %s30, 0
      %p176 = por %p174, %p175
      %p177 = scmp.le.s32.totalorder 1, %s24
      %p178 = scmp.lt.s32.totalorder %s24, 3
      %p179 = pnand %p177, %p178
      %p180 = pneg %p179
      // Predicated region
      $region9: #{tpu_custom_call.1} parent=5 // pred_check
        _
      $region10: #{tpu_custom_call.1} parent=5 // pred_check_branch
        %182 = sbr.rel (%p179) target = $region12
      $region11: #{tpu_custom_call.1} parent=5 // pred_region
        %s183 = ssub.s32 %s24, 1
        // Predicated region
        $region13: #{tpu_custom_call.1} parent=11 // pred_check
          %p184 = pneg %p57
        $region14: #{tpu_custom_call.1} parent=11 // pred_check_branch
          %186 = sbr.rel (%p184) target = $region16
        $region15: #{tpu_custom_call.1} parent=11 // pred_region
          _
        $region16: #{tpu_custom_call.1} parent=11 // pred_fallthru
          _
      $region12: #{tpu_custom_call.1} parent=5 // pred_fallthru
        _
      %p187 = scmp.lt.s32.totalorder %s24, 2
      // Predicated region
      $region17: #{tpu_custom_call.1} parent=5 // pred_check
        %p188 = pneg %p187
      $region18: #{tpu_custom_call.1} parent=5 // pred_check_branch
        %190 = sbr.rel (%p188) target = $region20
      $region19: #{tpu_custom_call.1} parent=5 // pred_region
        // Predicated region
        $region21: #{tpu_custom_call.1} parent=19 // pred_check
          %p191 = pneg %p79
        $region22: #{tpu_custom_call.1} parent=19 // pred_check_branch
          %193 = sbr.rel (%p191) target = $region24
        $region23: #{tpu_custom_call.1} parent=19 // pred_region
          %s194 = sand.u32 %s69, 1
          %s195 = scalar_lea.sflag [#allocation4], %s194
          %s196 = sand.u32 %s69, 1
          %s197 = smul.addr %s196, 8
          %s198 = scalar_lea.vmem [#allocation3], %s197
          %s200 = ssub.s32 128, 128
          %201 = vsyncadd %s195, %s200
          %s202 = smul.addr %s31, 4
          %s203 = sadd.s32 %s32, %s202
          %s204 = smul.addr %s203, 32
          %s205 = scalar_lea.hbm %s1, %s204
          %s206 = sshll.u32 %s198, 4
          %s207 = int_to_ptr.vmem [resolvable:$true] %s206
          %212 = dma.hbm_to_vmem [thread:$0]  %s205, 128, %s207, %s195, 32, 32, 2
        $region24: #{tpu_custom_call.1} parent=19 // pred_fallthru
          _
        // Predicated region
        $region25: #{tpu_custom_call.1} parent=19 // pred_check
          %p213 = pneg %p107
        $region26: #{tpu_custom_call.1} parent=19 // pred_check_branch
          %215 = sbr.rel (%p213) target = $region28
        $region27: #{tpu_custom_call.1} parent=19 // pred_region
          %s216 = sand.u32 %s97, 1
          %s217 = scalar_lea.sflag [#allocation7], %s216
          %s218 = sand.u32 %s97, 1
          %s219 = smul.addr %s218, 2
          %s220 = scalar_lea.vmem [#allocation6], %s219
          %s222 = ssub.s32 32, 32
          %223 = vsyncadd %s217, %s222
          %s224 = sadd.s32 %s32, %s31
          %s225 = smul.addr %s224, 32
          %s226 = scalar_lea.hbm %s2, %s225
          %s228 = sshll.u32 %s220, 4
          %s229 = int_to_ptr.vmem [resolvable:$true] %s228
          %231 = dma.hbm_to_vmem [thread:$0]  %s226, 32, %s229, %s217
        $region28: #{tpu_custom_call.1} parent=19 // pred_fallthru
          _
      $region20: #{tpu_custom_call.1} parent=5 // pred_fallthru
        _
      %p232 = scmp.le.s32.totalorder 1, %s24
      %p233 = scmp.lt.s32.totalorder %s24, 3
      %p234 = pnand %p232, %p233
      %p235 = pneg %p234
      // Predicated region
      $region29: #{tpu_custom_call.1} parent=5 // pred_check
        _
      $region30: #{tpu_custom_call.1} parent=5 // pred_check_branch
        %237 = sbr.rel (%p234) target = $region32
      $region31: #{tpu_custom_call.1} parent=5 // pred_region
        %s238 = ssub.s32 %s24, 1
        %s239 = sand.u32 %s72, 1
        %s240 = scalar_lea.sflag [#allocation4], %s239
        %s241 = sand.u32 %s72, 1
        %s242 = smul.addr %s241, 8
        %s243 = scalar_lea.vmem [#allocation3], %s242
        // Predicated region
        $region33: #{tpu_custom_call.1} parent=31 // pred_check
          %p244 = pneg %p85
        $region34: #{tpu_custom_call.1} parent=31 // pred_check_branch
          %246 = sbr.rel (%p244) target = $region36
        $region35: #{tpu_custom_call.1} parent=31 // pred_region
          %247 = dma.done %s240, 128
        $region36: #{tpu_custom_call.1} parent=31 // pred_fallthru
          _
        %s248 = sand.u32 %s100, 1
        %s249 = scalar_lea.sflag [#allocation7], %s248
        %s250 = sand.u32 %s100, 1
        %s251 = smul.addr %s250, 2
        %s252 = scalar_lea.vmem [#allocation6], %s251
        // Predicated region
        $region37: #{tpu_custom_call.1} parent=31 // pred_check
          %p253 = pneg %p113
        $region38: #{tpu_custom_call.1} parent=31 // pred_check_branch
          %255 = sbr.rel (%p253) target = $region40
        $region39: #{tpu_custom_call.1} parent=31 // pred_region
          %256 = dma.done %s249, 32
        $region40: #{tpu_custom_call.1} parent=31 // pred_fallthru
          _
        %p257 = pneg %p57
        %p258 = pneg %p54
        %s259 = sand.u32 %s72, 1
        %s260 = scalar_lea.sflag [#allocation4], %s259
        %s261 = sand.u32 %s72, 1
        %s262 = smul.addr %s261, 8
        %s263 = scalar_lea.vmem [#allocation3], %s262
        %p264 = pneg %p85
        %p265 = pneg %p82
        %s266 = sand.u32 %s100, 1
        %s267 = scalar_lea.sflag [#allocation7], %s266
        %s268 = sand.u32 %s100, 1
        %s269 = smul.addr %s268, 2
        %s270 = scalar_lea.vmem [#allocation6], %s269
        %p271 = pneg %p113
        %p272 = pneg %p110
        %p273 = pneg %p141
        %p274 = pneg %p138
        %s275 = sand.u32 %s128, 1
        %s276 = scalar_lea.sflag [#allocation5], %s275
        %s277 = sand.u32 %s128, 1
        %s278 = smul.addr %s277, 8
        %s279 = scalar_lea.vmem [#allocation8], %s278
        %p280 = pneg %p169
        %p281 = pneg %p166
        %s282 = sand.u32 %s156, 1
        %s283 = scalar_lea.sflag [#allocation10], %s282
        %s284 = sand.u32 %s156, 1
        %s285 = scalar_lea.vmem [#allocation9], %s284
        %s288 = sld [smem:[#allocation2]]
        %v289 = vld [vmem:[%s243] sm:$0x3]
        %v290 = vld [vmem:[%s243 + $0x2] sm:$0x3]
        %v291 = vld [vmem:[%s243 + $0x4] sm:$0x3]
        %v292 = vld [vmem:[%s243 + $0x6] sm:$0x3]
        %v293 = vld [vmem:[%s252] sm:$0x3]
        %vm294 = vcmp.gt.f32.partialorder %v289, 0.0
        %vm295 = vcmp.gt.f32.partialorder %v290, 0.0
        %vm296 = vmor %vm294, %vm295
        %vm297 = vcmp.gt.f32.partialorder %v291, 0.0
        %vm298 = vmor %vm296, %vm297
        %vm299 = vcmp.gt.f32.partialorder %v292, 0.0
        %vm300 = vmor %vm298, %vm299
        %v301 = vstv %s288
        %vm302 = vcmp.gt.f32.partialorder %v293, %v301
        %vm303 = vmand %vm302, %vm300
        %v304 = vsel %vm303, 1, 0
        %vm305 = vcmp.eq.s32.totalorder %v304, 1
        %v306 = vsel %vm305, %v289, 0.0
        %v307 = vsel %vm305, %v290, 0.0
        %v308 = vsel %vm305, %v291, 0.0
        %v309 = vsel %vm305, %v292, 0.0
        %310 = vst [vmem:[%s279] sm:$0x3] %v306
        %311 = vst [vmem:[%s279 + $0x2] sm:$0x3] %v307
        %312 = vst [vmem:[%s279 + $0x4] sm:$0x3] %v308
        %313 = vst [vmem:[%s279 + $0x6] sm:$0x3] %v309
        %vm314 = vmpackc.low %vm303, %vm303
        %vm315 = vmpackc.even %vm314, %vm314
        %v316 = vsel %vm315, 16843009, 0
        %vm317 = vcmask 1040384
        %vm318 = vsmask.f32 256
        %vm319 = vmand %vm317, %vm318
        %v320 = vld [vmem:[%s285] sm:$0x1]
        %v321 = vsel %vm319, %v316, %v320
        %322 = vst [vmem:[%s285] sm:$0x1] %v321
        %s323 = sand.u32 %s128, 1
        %s324 = scalar_lea.sflag [#allocation5], %s323
        %s325 = sand.u32 %s128, 1
        %s326 = smul.addr %s325, 8
        %s327 = scalar_lea.vmem [#allocation8], %s326
        %s328 = sand.u32 %s156, 1
        %s329 = scalar_lea.sflag [#allocation10], %s328
        %s330 = sand.u32 %s156, 1
        %s331 = scalar_lea.vmem [#allocation9], %s330
        // Predicated region
        $region41: #{tpu_custom_call.1} parent=31 // pred_check
          %p332 = pneg %p138
        $region42: #{tpu_custom_call.1} parent=31 // pred_check_branch
          %334 = sbr.rel (%p332) target = $region44
        $region43: #{tpu_custom_call.1} parent=31 // pred_region
          %s336 = ssub.s32 128, 128
          %337 = vsyncadd %s324, %s336
          %s338 = smul.addr %s33, 4
          %s339 = sadd.s32 %s34, %s338
          %s340 = smul.addr %s339, 32
          %s341 = scalar_lea.hbm %s3, %s340
          %s342 = sshll.u32 %s327, 4
          %s343 = int_to_ptr.vmem [resolvable:$true] %s342
          %348 = dma.vmem_to_hbm [thread:$0]  %s343, 128, %s341, %s324, 32, 32, 2
        $region44: #{tpu_custom_call.1} parent=31 // pred_fallthru
          _
        // Predicated region
        $region45: #{tpu_custom_call.1} parent=31 // pred_check
          %p349 = pneg %p166
        $region46: #{tpu_custom_call.1} parent=31 // pred_check_branch
          %351 = sbr.rel (%p349) target = $region48
        $region47: #{tpu_custom_call.1} parent=31 // pred_region
          %s353 = ssub.s32 16, 16
          %354 = vsyncadd %s329, %s353
          %s355 = sadd.s32 %s34, %s33
          %s356 = smul.addr %s355, 16
          %s357 = scalar_lea.hbm %s4, %s356
          %s359 = sshll.u32 %s331, 4
          %s360 = int_to_ptr.vmem [resolvable:$true] %s359
          %362 = dma.vmem_to_hbm [thread:$0]  %s360, 16, %s357, %s329
        $region48: #{tpu_custom_call.1} parent=31 // pred_fallthru
          _
      $region32: #{tpu_custom_call.1} parent=5 // pred_fallthru
        _
      %p363 = scmp.le.s32.totalorder 2, %s24
      // Predicated region
      $region49: #{tpu_custom_call.1} parent=5 // pred_check
        %p364 = pneg %p363
      $region50: #{tpu_custom_call.1} parent=5 // pred_check_branch
        %366 = sbr.rel (%p364) target = $region52
      $region51: #{tpu_custom_call.1} parent=5 // pred_region
        %s367 = ssub.s32 %s24, 2
        // Predicated region
        $region53: #{tpu_custom_call.1} parent=51 // pred_check
          %p368 = pneg %p144
        $region54: #{tpu_custom_call.1} parent=51 // pred_check_branch
          %370 = sbr.rel (%p368) target = $region56
        $region55: #{tpu_custom_call.1} parent=51 // pred_region
          %s371 = sand.u32 %s129, 1
          %s372 = scalar_lea.sflag [#allocation5], %s371
          %s373 = sand.u32 %s129, 1
          %s374 = smul.addr %s373, 8
          %s375 = scalar_lea.vmem [#allocation8], %s374
          %376 = dma.done %s372, 128
        $region56: #{tpu_custom_call.1} parent=51 // pred_fallthru
          _
        // Predicated region
        $region57: #{tpu_custom_call.1} parent=51 // pred_check
          %p377 = pneg %p172
        $region58: #{tpu_custom_call.1} parent=51 // pred_check_branch
          %379 = sbr.rel (%p377) target = $region60
        $region59: #{tpu_custom_call.1} parent=51 // pred_region
          %s380 = sand.u32 %s157, 1
          %s381 = scalar_lea.sflag [#allocation10], %s380
          %s382 = sand.u32 %s157, 1
          %s383 = scalar_lea.vmem [#allocation9], %s382
          %384 = dma.done %s381, 16
        $region60: #{tpu_custom_call.1} parent=51 // pred_fallthru
          _
      $region52: #{tpu_custom_call.1} parent=5 // pred_fallthru
        _
    $region6: #{tpu_custom_call.1} parent=1 // loop_footer
      %s28 = sadd.s32 1, %s24
    $region7: #{tpu_custom_call.1} parent=1 // loop_footer_branch
      %23 = sbr.rel target = $region3
    $region8: #{tpu_custom_call.1} parent=1 // loop_exit
      _
    %385 = vsyncpa [#allocation4], 1
    %s386 = scalar_lea.sflag [#allocation4], 1
    %387 = vsyncpa %s386, 1
    %388 = vsyncpa [#allocation7], 1
    %s389 = scalar_lea.sflag [#allocation7], 1
    %390 = vsyncpa %s389, 1
    %391 = vsyncpa [#allocation5], 1
    %s392 = scalar_lea.sflag [#allocation5], 1
    %393 = vsyncpa %s392, 1
    %394 = vsyncpa [#allocation10], 1
    %s395 = scalar_lea.sflag [#allocation10], 1
    %396 = vsyncpa %s395, 1

</llo_original>
